<compile_context>
chip_gen: v7x
topology: tpu7x:2x2x1
jax: 0.10.0
libtpu: 0.0.40
codegen_flags: <defaults>
</compile_context>

<pallas_src>
import math

import jax
import jax.numpy as jnp
from jax.experimental import pallas as pl
from jax.experimental.pallas import tpu as pltpu


def ffn_kernel(x_ref, w1t_ref, b1_ref, w2t_ref, b2_ref, o_ref):
    """x: (N, d_model); w1t: (d_model, d_ff); w2t: (d_ff, d_model)."""
    x = x_ref[...].astype(jnp.float32)

    # fc1 + ReLU  (weights already transposed in the wrapper: no .T in-kernel)
    h = jnp.dot(x, w1t_ref[...], preferred_element_type=jnp.float32) + b1_ref[...]
    h = jnp.maximum(h, 0.0)

    # fc2
    y = jnp.dot(h, w2t_ref[...], preferred_element_type=jnp.float32) + b2_ref[...]
    o_ref[...] = y.astype(o_ref.dtype)


def position_wise_feed_forward(x, params):
    """x: (B, S, d_model). params = (w1, b1, w2, b2) in PyTorch Linear layout."""
    w1, b1, w2, b2 = params
    B, S, D = x.shape
    d_ff = w1.shape[0]

    # Fold batch*seq into the sublane dimension; pre-transpose weights once.
    x2 = x.reshape(B * S, D)
    w1t = w1.T                      # (d_model, d_ff)
    w2t = w2.T                      # (d_ff, d_model)
    b1_2 = b1.reshape(1, d_ff)      # >=2D for TPU layout; broadcasts over rows
    b2_2 = b2.reshape(1, D)

    vmem_spec = pl.BlockSpec(memory_space=pltpu.MemorySpace.VMEM)

    out = pl.pallas_call(
        ffn_kernel,
        out_shape=jax.ShapeDtypeStruct((B * S, D), x.dtype),
        # No grid: the whole working set (~3 KiB) fits trivially in VMEM and
        # runs in a single invocation — no per-step pipeline overhead.
        in_specs=[vmem_spec] * 5,
        out_specs=vmem_spec,
    )(x2, w1t, b1_2, w2t, b2_2)

    return out.reshape(B, S, D)


def reference_ffn(x, params):
    """Plain-JAX reference matching the PyTorch module semantics."""
    w1, b1, w2, b2 = params
    h = jnp.maximum(jnp.einsum("bsd,fd->bsf", x, w1) + b1, 0.0)
    return jnp.einsum("bsf,df->bsd", h, w2) + b2


def init_params(key, d_model, d_ff):
    """PyTorch-style Linear init: U(-1/sqrt(fan_in), 1/sqrt(fan_in))."""
    k1, k2, k3, k4 = jax.random.split(key, 4)
    bound1 = 1.0 / math.sqrt(d_model)
    bound2 = 1.0 / math.sqrt(d_ff)
    w1 = jax.random.uniform(k1, (d_ff, d_model), minval=-bound1, maxval=bound1,
                            dtype=jnp.float32)
    b1 = jax.random.uniform(k2, (d_ff,), minval=-bound1, maxval=bound1,
                            dtype=jnp.float32)
    w2 = jax.random.uniform(k3, (d_model, d_ff), minval=-bound2, maxval=bound2,
                            dtype=jnp.float32)
    b2 = jax.random.uniform(k4, (d_model,), minval=-bound2, maxval=bound2,
                            dtype=jnp.float32)
    return (w1, b1, w2, b2)


if __name__ == "__main__":
    d_model = 8
    d_ff = 32
    batch = 2
    seq = 8

    key = jax.random.PRNGKey(0)
    kx, kp = jax.random.split(key)
    x = jax.random.normal(kx, (batch, seq, d_model), dtype=jnp.float32)
    params = init_params(kp, d_model, d_ff)

    out = position_wise_feed_forward(x, params)
    out = jax.block_until_ready(out)

    ref = reference_ffn(x, params)
    assert out.shape == (batch, seq, d_model)
    assert jnp.allclose(out, ref, atol=1e-5, rtol=1e-5), "mismatch vs reference"

    print("KERNEL_OK")
</pallas_src>

<mosaic_0001>
module attributes {stable_mosaic.version = 11 : i64} {
  func.func @ffn_kernel(%arg0: memref<16x8xf32, #tpu.memory_space<vmem>>, %arg1: memref<8x32xf32, #tpu.memory_space<vmem>>, %arg2: memref<1x32xf32, #tpu.memory_space<vmem>>, %arg3: memref<32x8xf32, #tpu.memory_space<vmem>>, %arg4: memref<1x8xf32, #tpu.memory_space<vmem>>, %arg5: memref<16x8xf32, #tpu.memory_space<vmem>>) attributes {dimension_semantics = [], scalar_prefetch = 0 : i64, scratch_operands = 0 : i64, tpu.core_type = #tpu.core_type<tc>} {
    %c0 = arith.constant 0 : index
    %c0_0 = arith.constant 0 : index
    %0 = vector.load %arg0[%c0, %c0_0] : memref<16x8xf32, #tpu.memory_space<vmem>>, vector<16x8xf32>
    %c0_1 = arith.constant 0 : index
    %c0_2 = arith.constant 0 : index
    %1 = vector.load %arg1[%c0_1, %c0_2] : memref<8x32xf32, #tpu.memory_space<vmem>>, vector<8x32xf32>
    %cst = arith.constant dense<0.000000e+00> : vector<16x32xf32>
    %2 = tpu.matmul %0, %1, %cst {dimension_numbers = #tpu.dot_dimension_numbers<[1], [0], [0], [1], [0, 0, 1, 1], [], []>} : vector<16x8xf32>, vector<8x32xf32>, vector<16x32xf32> -> vector<16x32xf32>
    %c0_3 = arith.constant 0 : index
    %c0_4 = arith.constant 0 : index
    %3 = vector.load %arg2[%c0_3, %c0_4] : memref<1x32xf32, #tpu.memory_space<vmem>>, vector<1x32xf32>
    %4 = vector.broadcast %3 : vector<1x32xf32> to vector<16x32xf32>
    %5 = arith.addf %2, %4 : vector<16x32xf32>
    %cst_5 = arith.constant 0.000000e+00 : f32
    %6 = vector.broadcast %cst_5 : f32 to vector<16x32xf32>
    %7 = arith.maximumf %5, %6 : vector<16x32xf32>
    %c0_6 = arith.constant 0 : index
    %c0_7 = arith.constant 0 : index
    %8 = vector.load %arg3[%c0_6, %c0_7] : memref<32x8xf32, #tpu.memory_space<vmem>>, vector<32x8xf32>
    %cst_8 = arith.constant dense<0.000000e+00> : vector<16x8xf32>
    %9 = tpu.matmul %7, %8, %cst_8 {dimension_numbers = #tpu.dot_dimension_numbers<[1], [0], [0], [1], [0, 0, 1, 1], [], []>} : vector<16x32xf32>, vector<32x8xf32>, vector<16x8xf32> -> vector<16x8xf32>
    %c0_9 = arith.constant 0 : index
    %c0_10 = arith.constant 0 : index
    %10 = vector.load %arg4[%c0_9, %c0_10] : memref<1x8xf32, #tpu.memory_space<vmem>>, vector<1x8xf32>
    %11 = vector.broadcast %10 : vector<1x8xf32> to vector<16x8xf32>
    %12 = arith.addf %9, %11 : vector<16x8xf32>
    %c0_11 = arith.constant 0 : index
    %c0_12 = arith.constant 0 : index
    %13 = vector.load %arg5[%c0_11, %c0_12] : memref<16x8xf32, #tpu.memory_space<vmem>>, vector<16x8xf32>
    tpu.vector_store %arg5[%c0_11, %c0_12], %12 {strides = array<i32>} : memref<16x8xf32, #tpu.memory_space<vmem>>, vector<16x8xf32>,
    return
  }
}

</mosaic_0001>

<llo_original>
// kernel: tpu_custom_call.1
$region0: #{tpu_custom_call.1}
  #allocation0 [shape = 'u32[]', space=smem, size = 0x4, offset = 0x4, fixed_abs, tag = 'smem constant byte address 0x4 - core index']
  #allocation1 [shape = 'u32[144,128]{1,0:T(1,128)}', space=vmem, size = 0x12000, scoped, tag = 'internal scratch']
  %s0 = inlined_call_operand.vmem [shape: f32[16,8], index: 0, kind: input, shape index: {}]
  %s1 = inlined_call_operand.vmem [shape: f32[8,32], index: 1, kind: input, shape index: {}]
  %s2 = inlined_call_operand.vmem [shape: f32[1,32], index: 2, kind: input, shape index: {}]
  %s3 = inlined_call_operand.vmem [shape: f32[32,8], index: 3, kind: input, shape index: {}]
  %s4 = inlined_call_operand.vmem [shape: f32[1,8], index: 4, kind: input, shape index: {}]
  %s5 = inlined_call_operand.vmem [shape: f32[16,8], index: 5, kind: output, shape index: {}]
  %s6 = sld [smem:[#allocation0]]
  $region30: #{tpu_custom_call.1} parent=0
    _
  %s8 = ssub.s32 1, %s6
  %s9 = scalar_select 0, %s8, %s6
  // Predicated region
  $region2: #{tpu_custom_call.1} parent=0 // pred_check
    _
  $region3: #{tpu_custom_call.1} parent=0 // pred_check_branch
    %11 = sbr.rel (0) target = $region5
  $region4: #{tpu_custom_call.1} parent=0 // pred_region
    _
  $region5: #{tpu_custom_call.1} parent=0 // pred_fallthru
    _
  // Predicated region
  $region6: #{tpu_custom_call.1} parent=0 // pred_check
    _
  $region7: #{tpu_custom_call.1} parent=0 // pred_check_branch
    %13 = sbr.rel (0) target = $region9
  $region8: #{tpu_custom_call.1} parent=0 // pred_region
    _
  $region9: #{tpu_custom_call.1} parent=0 // pred_fallthru
    _
  // Predicated region
  $region10: #{tpu_custom_call.1} parent=0 // pred_check
    _
  $region11: #{tpu_custom_call.1} parent=0 // pred_check_branch
    %15 = sbr.rel (0) target = $region13
  $region12: #{tpu_custom_call.1} parent=0 // pred_region
    _
  $region13: #{tpu_custom_call.1} parent=0 // pred_fallthru
    _
  // Predicated region
  $region14: #{tpu_custom_call.1} parent=0 // pred_check
    _
  $region15: #{tpu_custom_call.1} parent=0 // pred_check_branch
    %17 = sbr.rel (0) target = $region17
  $region16: #{tpu_custom_call.1} parent=0 // pred_region
    _
  $region17: #{tpu_custom_call.1} parent=0 // pred_fallthru
    _
  // Predicated region
  $region18: #{tpu_custom_call.1} parent=0 // pred_check
    _
  $region19: #{tpu_custom_call.1} parent=0 // pred_check_branch
    %19 = sbr.rel (0) target = $region21
  $region20: #{tpu_custom_call.1} parent=0 // pred_region
    _
  $region21: #{tpu_custom_call.1} parent=0 // pred_fallthru
    _
  %v20 = vld [vmem:[%s0] sm:$0xff]
  %v21 = vld [vmem:[%s0 + $0x8] sm:$0xff]
  %v22 = vld [vmem:[%s1] sm:$0xff]
  %v23 = vld [vmem:[%s2] sm:$0x1]
  %v25 = vlaneseq
  %v26 = vshrl.u32 %v25, 7
  %v27 = vsub.s32 0, %v26
  %v28 = vrot.slane %v23, %v27
  %vm30 = vcmask 64512
  %v32 = vsel %vm30, %v20, 0
  %v35 = vsel %vm30, %v21, 0
  %37 = vmatprep.subr.mxu0 0.0
  %38 = vmatpush1.msra.mxu0 %v22
  %39 = vmatprep.subr.mxu0 0.0
  %40 = vmatpush1.msra.mxu0 0.0
  %41 = vmatprep.subr.mxu0 0.0
  %42 = vmatpush1.msra.mxu0 0.0
  %43 = vmatprep.subr.mxu0 0.0
  %44 = vmatpush1.msra.mxu0 0.0
  %45 = vmatprep.subr.mxu0 0.0
  %46 = vmatpush1.msra.mxu0 0.0
  %47 = vmatprep.subr.mxu0 0.0
  %48 = vmatpush1.msra.mxu0 0.0
  %49 = vmatprep.subr.mxu0 0.0
  %50 = vmatpush1.msra.mxu0 0.0
  %51 = vmatprep.subr.mxu0 0.0
  %52 = vmatpush1.msra.mxu0 0.0
  %53 = vmatprep.subr.mxu0 0.0
  %54 = vmatpush1.msra.mxu0 0.0
  %55 = vmatprep.subr.mxu0 0.0
  %56 = vmatpush1.msra.mxu0 0.0
  %57 = vmatprep.subr.mxu0 0.0
  %58 = vmatpush1.msra.mxu0 0.0
  %59 = vmatprep.subr.mxu0 0.0
  %60 = vmatpush1.msra.mxu0 0.0
  %61 = vmatprep.subr.mxu0 0.0
  %62 = vmatpush1.msra.mxu0 0.0
  %63 = vmatprep.subr.mxu0 0.0
  %64 = vmatpush1.msra.mxu0 0.0
  %65 = vmatprep.subr.mxu0 0.0
  %66 = vmatpush1.msra.mxu0 0.0
  %67 = vmatprep.subr.mxu0 0.0
  %68 = vmatpush1.msra.mxu0 0.0
  %69 = vmatprep.subr.mxu0 0.0
  %70 = vmatpush1.msra.mxu0 0.0
  %71 = vmatprep.subr.mxu0 0.0
  %72 = vmatpush1.msra.mxu0 0.0
  %73 = vmatprep.subr.mxu0 0.0
  %74 = vmatpush1.msra.mxu0 0.0
  %75 = vmatprep.subr.mxu0 0.0
  %76 = vmatpush1.msra.mxu0 0.0
  %77 = vmatprep.subr.mxu0 0.0
  %78 = vmatpush1.msra.mxu0 0.0
  %79 = vmatprep.subr.mxu0 0.0
  %80 = vmatpush1.msra.mxu0 0.0
  %81 = vmatprep.subr.mxu0 0.0
  %82 = vmatpush1.msra.mxu0 0.0
  %83 = vmatprep.subr.mxu0 0.0
  %84 = vmatpush1.msra.mxu0 0.0
  %85 = vmatprep.subr.mxu0 0.0
  %86 = vmatpush1.msra.mxu0 0.0
  %87 = vmatprep.subr.mxu0 0.0
  %88 = vmatpush1.msra.mxu0 0.0
  %89 = vmatprep.subr.mxu0 0.0
  %90 = vmatpush1.msra.mxu0 0.0
  %91 = vmatprep.subr.mxu0 0.0
  %92 = vmatpush1.msra.mxu0 0.0
  %93 = vmatprep.subr.mxu0 0.0
  %94 = vmatpush1.msra.mxu0 0.0
  %95 = vmatprep.subr.mxu0 0.0
  %96 = vmatpush1.msra.mxu0 0.0
  %97 = vmatprep.subr.mxu0 0.0
  %98 = vmatpush1.msra.mxu0 0.0
  %99 = vmatprep.subr.mxu0 0.0
  %100 = vmatpush1.msra.mxu0 0.0
  %101 = vmatprep.mubr.f32.mxu0 0.0
  %102 = vmatmul.mubr.f32.gmra.mrb[0].mxu0 %v32
  %v103 = vpop.f32.mrb[0].mxu0
  %v104 = vadd.f32 %v28, %v103
  %v105 = vpop.f32.mrb[0].mxu0
  %106 = vmatprep.mubr.f32.mxu0 0.0
  %107 = vmatmul.mubr.f32.gmra.mrb[0].mxu0 %v35
  %v108 = vpop.f32.mrb[0].mxu0
  %v109 = vadd.f32 %v28, %v108
  %v110 = vpop.f32.mrb[0].mxu0
  %111 = vdwg.mxu0
  %v112 = vmax.f32 %v104, 0.0
  %v113 = vmax.f32 %v109, 0.0
  %v114 = vld [vmem:[%s3] sm:$0xff]
  %v115 = vld [vmem:[%s3 + $0x8] sm:$0xff]
  %v116 = vld [vmem:[%s3 + $0x10] sm:$0xff]
  %v117 = vld [vmem:[%s3 + $0x18] sm:$0xff]
  %v118 = vld [vmem:[%s4] sm:$0x1]
  %v120 = vlaneseq
  %v121 = vshrl.u32 %v120, 7
  %v122 = vsub.s32 0, %v121
  %v123 = vrot.slane %v118, %v122
  %vm125 = vcmask 261120
  %v127 = vsel %vm125, %v112, 0
  %v130 = vsel %vm125, %v113, 0
  %132 = vmatprep.subr.mxu0 0.0
  %133 = vmatpush1.msra.mxu0 %v114
  %134 = vmatprep.subr.mxu0 0.0
  %135 = vmatpush1.msra.mxu0 %v115
  %136 = vmatprep.subr.mxu0 0.0
  %137 = vmatpush1.msra.mxu0 %v116
  %138 = vmatprep.subr.mxu0 0.0
  %139 = vmatpush1.msra.mxu0 %v117
  %140 = vmatprep.subr.mxu0 0.0
  %141 = vmatpush1.msra.mxu0 0.0
  %142 = vmatprep.subr.mxu0 0.0
  %143 = vmatpush1.msra.mxu0 0.0
  %144 = vmatprep.subr.mxu0 0.0
  %145 = vmatpush1.msra.mxu0 0.0
  %146 = vmatprep.subr.mxu0 0.0
  %147 = vmatpush1.msra.mxu0 0.0
  %148 = vmatprep.subr.mxu0 0.0
  %149 = vmatpush1.msra.mxu0 0.0
  %150 = vmatprep.subr.mxu0 0.0
  %151 = vmatpush1.msra.mxu0 0.0
  %152 = vmatprep.subr.mxu0 0.0
  %153 = vmatpush1.msra.mxu0 0.0
  %154 = vmatprep.subr.mxu0 0.0
  %155 = vmatpush1.msra.mxu0 0.0
  %156 = vmatprep.subr.mxu0 0.0
  %157 = vmatpush1.msra.mxu0 0.0
  %158 = vmatprep.subr.mxu0 0.0
  %159 = vmatpush1.msra.mxu0 0.0
  %160 = vmatprep.subr.mxu0 0.0
  %161 = vmatpush1.msra.mxu0 0.0
  %162 = vmatprep.subr.mxu0 0.0
  %163 = vmatpush1.msra.mxu0 0.0
  %164 = vmatprep.subr.mxu0 0.0
  %165 = vmatpush1.msra.mxu0 0.0
  %166 = vmatprep.subr.mxu0 0.0
  %167 = vmatpush1.msra.mxu0 0.0
  %168 = vmatprep.subr.mxu0 0.0
  %169 = vmatpush1.msra.mxu0 0.0
  %170 = vmatprep.subr.mxu0 0.0
  %171 = vmatpush1.msra.mxu0 0.0
  %172 = vmatprep.subr.mxu0 0.0
  %173 = vmatpush1.msra.mxu0 0.0
  %174 = vmatprep.subr.mxu0 0.0
  %175 = vmatpush1.msra.mxu0 0.0
  %176 = vmatprep.subr.mxu0 0.0
  %177 = vmatpush1.msra.mxu0 0.0
  %178 = vmatprep.subr.mxu0 0.0
  %179 = vmatpush1.msra.mxu0 0.0
  %180 = vmatprep.subr.mxu0 0.0
  %181 = vmatpush1.msra.mxu0 0.0
  %182 = vmatprep.subr.mxu0 0.0
  %183 = vmatpush1.msra.mxu0 0.0
  %184 = vmatprep.subr.mxu0 0.0
  %185 = vmatpush1.msra.mxu0 0.0
  %186 = vmatprep.subr.mxu0 0.0
  %187 = vmatpush1.msra.mxu0 0.0
  %188 = vmatprep.subr.mxu0 0.0
  %189 = vmatpush1.msra.mxu0 0.0
  %190 = vmatprep.subr.mxu0 0.0
  %191 = vmatpush1.msra.mxu0 0.0
  %192 = vmatprep.subr.mxu0 0.0
  %193 = vmatpush1.msra.mxu0 0.0
  %194 = vmatprep.subr.mxu0 0.0
  %195 = vmatpush1.msra.mxu0 0.0
  %196 = vmatprep.mubr.f32.mxu0 0.0
  %197 = vmatmul.mubr.f32.gmra.mrb[0].mxu0 %v127
  %v198 = vpop.f32.mrb[0].mxu0
  %v199 = vadd.f32 %v123, %v198
  %v200 = vpop.f32.mrb[0].mxu0
  %201 = vmatprep.mubr.f32.mxu0 0.0
  %202 = vmatmul.mubr.f32.gmra.mrb[0].mxu0 %v130
  %v203 = vpop.f32.mrb[0].mxu0
  %v204 = vadd.f32 %v123, %v203
  %v205 = vpop.f32.mrb[0].mxu0
  %206 = vdwg.mxu0
  %207 = vst.msk [vmem:[%s5] sm:$0xff] %vm30, %v199
  %208 = vst.msk [vmem:[%s5 + $0x8] sm:$0xff] %vm30, %v204
  // Predicated region
  $region22: #{tpu_custom_call.1} parent=0 // pred_check
    _
  $region23: #{tpu_custom_call.1} parent=0 // pred_check_branch
    %210 = sbr.rel (0) target = $region25
  $region24: #{tpu_custom_call.1} parent=0 // pred_region
    _
  $region25: #{tpu_custom_call.1} parent=0 // pred_fallthru
    _
  // Predicated region
  $region26: #{tpu_custom_call.1} parent=0 // pred_check
    _
  $region27: #{tpu_custom_call.1} parent=0 // pred_check_branch
    %212 = sbr.rel (0) target = $region29
  $region28: #{tpu_custom_call.1} parent=0 // pred_region
    _
  $region29: #{tpu_custom_call.1} parent=0 // pred_fallthru
    _

</llo_original>
